<compile_context>
chip_gen: v7x
topology: tpu7x:2x2x1
jax: 0.10.0
libtpu: 0.0.40
codegen_flags: <defaults>
</compile_context>

<pallas_src>
import functools
import math

import jax
import jax.numpy as jnp
from jax.experimental import pallas as pl
from jax.experimental.pallas import tpu as pltpu


# ----------------------------------------------------------------------------
# Activation helpers (mirror get_activation in the PyTorch module).
# ----------------------------------------------------------------------------
def _apply_activation(y, s_act):
    if s_act == "relu":
        return jnp.maximum(y, 0.0)
    elif s_act == "sigmoid":
        return jax.nn.sigmoid(y)
    elif s_act == "softplus":
        return jax.nn.softplus(y)
    elif s_act == "linear" or s_act is None:
        return y
    elif s_act == "tanh":
        return jnp.tanh(y)
    elif s_act == "leakyrelu":
        # nn.LeakyReLU(0.2) in the original module.
        return jnp.where(y >= 0.0, y, 0.2 * y)
    elif s_act == "softmax":
        # nn.Softmax(dim=1) over the feature axis; exact because the full
        # feature axis lives in one (un-tiled) block.
        return jax.nn.softmax(y, axis=1)
    elif s_act == "selu":
        return jax.nn.selu(y)
    elif s_act == "elu":
        return jax.nn.elu(y)
    else:
        raise ValueError(f"Unexpected activation: {s_act}")


# ----------------------------------------------------------------------------
# Fused Pallas kernel: the whole MLP in one call.
#   refs layout: (x_ref, w0, b0, w1, b1, ..., w_{n-1}, b_{n-1}, o_ref)
# Intermediate activations stay in VMEM / vregs for the entire kernel; only
# the final result is written back.
# ----------------------------------------------------------------------------
def _fc_vec_kernel(x_ref, *refs, activations):
    o_ref = refs[-1]
    wb_refs = refs[:-1]
    n_layers = len(wb_refs) // 2
    assert n_layers == len(activations)

    h = x_ref[...].astype(jnp.float32)          # (B_tile, D_in)
    for i in range(n_layers):
        w = wb_refs[2 * i][...]                 # (D_in_i, D_out_i)
        b = wb_refs[2 * i + 1][...]             # (1, D_out_i)
        h = jnp.dot(h, w, preferred_element_type=jnp.float32) + b  # MXU + VPU
        h = _apply_activation(h, activations[i])                   # VPU/EUP
    o_ref[...] = h.astype(o_ref.dtype)


def make_fc_vec_forward(activations, *, batch_tile=128):
    """Build a jitted fused forward pass for a fixed per-layer activation list.

    If the batch is large and divisible by `batch_tile`, the batch axis is
    tiled with a "parallel" grid (v7x megacore friendly); otherwise a 0-D grid
    (single full-array block) is used — the right choice for tiny MLPs.
    """
    activations = tuple(activations)
    kernel = functools.partial(_fc_vec_kernel, activations=activations)

    @jax.jit
    def forward(params, x):
        flat = []
        for w, b in params:
            flat.append(w)
            flat.append(b)
        B, d_in = x.shape
        d_out = params[-1][0].shape[1]
        n_wb = len(flat)

        tile_batch = (B >= 2 * batch_tile) and (B % batch_tile == 0)

        if not tile_batch:
            # 0-D grid: every operand is a full-array VMEM block.
            return pl.pallas_call(
                kernel,
                out_shape=jax.ShapeDtypeStruct((B, d_out), x.dtype),
                in_specs=[pl.BlockSpec(memory_space=pltpu.MemorySpace.VMEM)]
                * (1 + n_wb),
                out_specs=pl.BlockSpec(memory_space=pltpu.MemorySpace.VMEM),
            )(x, *flat)

        # Batch-tiled path: grid over batch only; weights/biases are full
        # blocks replicated across grid steps (they stay resident in VMEM).
        wb_specs = [
            pl.BlockSpec(a.shape, lambda i, _s=a.shape: (0,) * len(_s))
            for a in flat
        ]
        return pl.pallas_call(
            kernel,
            out_shape=jax.ShapeDtypeStruct((B, d_out), x.dtype),
            grid=(B // batch_tile,),
            in_specs=[pl.BlockSpec((batch_tile, d_in), lambda i: (i, 0))]
            + wb_specs,
            out_specs=pl.BlockSpec((batch_tile, d_out), lambda i: (i, 0)),
            compiler_params=pltpu.CompilerParams(
                dimension_semantics=("parallel",)
            ),
        )(x, *flat)

    return forward


# ----------------------------------------------------------------------------
# FC_vec: parameter construction + pure-JAX reference.
# ----------------------------------------------------------------------------
def init_fc_vec_params(key, in_chan, out_chan, l_hidden):
    """Deterministic init mimicking nn.Linear's default (uniform +-1/sqrt(fan_in))."""
    dims = [in_chan] + list(l_hidden) + [out_chan]
    params = []
    for i in range(len(dims) - 1):
        d_in, d_out = dims[i], dims[i + 1]
        key, kw, kb = jax.random.split(key, 3)
        bound = 1.0 / math.sqrt(d_in)
        w = jax.random.uniform(kw, (d_in, d_out), jnp.float32, -bound, bound)
        b = jax.random.uniform(kb, (1, d_out), jnp.float32, -bound, bound)
        params.append((w, b))
    return params


def fc_vec_reference(params, activations, x):
    h = x
    for (w, b), act in zip(params, activations):
        h = _apply_activation(h @ w + b, act)
    return h


if __name__ == "__main__":
    # Module configuration (consistent with FC_vec's constructor defaults).
    in_chan = 2
    out_chan = 1
    l_hidden = [32, 32]
    activation = ["relu", "relu"]
    out_activation = "linear"
    activations = activation + [out_activation]   # per-layer activation list

    batch = 8

    key = jax.random.PRNGKey(0)
    key, kx = jax.random.split(key)
    x = jax.random.normal(kx, (batch, in_chan), dtype=jnp.float32)

    params = init_fc_vec_params(key, in_chan, out_chan, l_hidden)

    forward = make_fc_vec_forward(activations)
    out = forward(params, x)
    out = jax.block_until_ready(out)

    # Sanity check against pure-JAX reference.
    ref = fc_vec_reference(params, activations, x)
    assert out.shape == (batch, out_chan), out.shape
    assert jnp.allclose(out, ref, atol=1e-5, rtol=1e-5), "mismatch vs reference"

    print("KERNEL_OK")
</pallas_src>

<mosaic_0001>
module attributes {stable_mosaic.version = 11 : i64} {
  func.func @_fc_vec_kernel(%arg0: memref<8x2xf32, #tpu.memory_space<vmem>>, %arg1: memref<2x32xf32, #tpu.memory_space<vmem>>, %arg2: memref<1x32xf32, #tpu.memory_space<vmem>>, %arg3: memref<32x32xf32, #tpu.memory_space<vmem>>, %arg4: memref<1x32xf32, #tpu.memory_space<vmem>>, %arg5: memref<32x1xf32, #tpu.memory_space<vmem>>, %arg6: memref<1x1xf32, #tpu.memory_space<vmem>>, %arg7: memref<8x1xf32, #tpu.memory_space<vmem>>) attributes {dimension_semantics = [], scalar_prefetch = 0 : i64, scratch_operands = 0 : i64, tpu.core_type = #tpu.core_type<tc>} {
    %c0 = arith.constant 0 : index
    %c0_0 = arith.constant 0 : index
    %0 = vector.load %arg0[%c0, %c0_0] : memref<8x2xf32, #tpu.memory_space<vmem>>, vector<8x2xf32>
    %c0_1 = arith.constant 0 : index
    %c0_2 = arith.constant 0 : index
    %1 = vector.load %arg1[%c0_1, %c0_2] : memref<2x32xf32, #tpu.memory_space<vmem>>, vector<2x32xf32>
    %c0_3 = arith.constant 0 : index
    %c0_4 = arith.constant 0 : index
    %2 = vector.load %arg2[%c0_3, %c0_4] : memref<1x32xf32, #tpu.memory_space<vmem>>, vector<1x32xf32>
    %cst = arith.constant dense<0.000000e+00> : vector<8x32xf32>
    %3 = tpu.matmul %0, %1, %cst {dimension_numbers = #tpu.dot_dimension_numbers<[1], [0], [0], [1], [0, 0, 1, 1], [], []>} : vector<8x2xf32>, vector<2x32xf32>, vector<8x32xf32> -> vector<8x32xf32>
    %4 = vector.broadcast %2 : vector<1x32xf32> to vector<8x32xf32>
    %5 = arith.addf %3, %4 : vector<8x32xf32>
    %cst_5 = arith.constant 0.000000e+00 : f32
    %6 = vector.broadcast %cst_5 : f32 to vector<8x32xf32>
    %7 = arith.maximumf %5, %6 : vector<8x32xf32>
    %c0_6 = arith.constant 0 : index
    %c0_7 = arith.constant 0 : index
    %8 = vector.load %arg3[%c0_6, %c0_7] : memref<32x32xf32, #tpu.memory_space<vmem>>, vector<32x32xf32>
    %c0_8 = arith.constant 0 : index
    %c0_9 = arith.constant 0 : index
    %9 = vector.load %arg4[%c0_8, %c0_9] : memref<1x32xf32, #tpu.memory_space<vmem>>, vector<1x32xf32>
    %cst_10 = arith.constant dense<0.000000e+00> : vector<8x32xf32>
    %10 = tpu.matmul %7, %8, %cst_10 {dimension_numbers = #tpu.dot_dimension_numbers<[1], [0], [0], [1], [0, 0, 1, 1], [], []>} : vector<8x32xf32>, vector<32x32xf32>, vector<8x32xf32> -> vector<8x32xf32>
    %11 = vector.broadcast %9 : vector<1x32xf32> to vector<8x32xf32>
    %12 = arith.addf %10, %11 : vector<8x32xf32>
    %cst_11 = arith.constant 0.000000e+00 : f32
    %13 = vector.broadcast %cst_11 : f32 to vector<8x32xf32>
    %14 = arith.maximumf %12, %13 : vector<8x32xf32>
    %c0_12 = arith.constant 0 : index
    %c0_13 = arith.constant 0 : index
    %15 = vector.load %arg5[%c0_12, %c0_13] : memref<32x1xf32, #tpu.memory_space<vmem>>, vector<32x1xf32>
    %c0_14 = arith.constant 0 : index
    %c0_15 = arith.constant 0 : index
    %16 = vector.load %arg6[%c0_14, %c0_15] : memref<1x1xf32, #tpu.memory_space<vmem>>, vector<1x1xf32>
    %cst_16 = arith.constant dense<0.000000e+00> : vector<8x1xf32>
    %17 = tpu.matmul %14, %15, %cst_16 {dimension_numbers = #tpu.dot_dimension_numbers<[1], [0], [0], [1], [0, 0, 1, 1], [], []>} : vector<8x32xf32>, vector<32x1xf32>, vector<8x1xf32> -> vector<8x1xf32>
    %18 = vector.broadcast %16 : vector<1x1xf32> to vector<8x1xf32>
    %19 = arith.addf %17, %18 : vector<8x1xf32>
    %c0_17 = arith.constant 0 : index
    %c0_18 = arith.constant 0 : index
    %20 = vector.load %arg7[%c0_17, %c0_18] : memref<8x1xf32, #tpu.memory_space<vmem>>, vector<8x1xf32>
    tpu.vector_store %arg7[%c0_17, %c0_18], %19 {strides = array<i32>} : memref<8x1xf32, #tpu.memory_space<vmem>>, vector<8x1xf32>,
    return
  }
}

</mosaic_0001>

<llo_original>
// kernel: forward.1
$region0: #{forward.1}
  #allocation0 [shape = 'u32[]', space=smem, size = 0x4, offset = 0x4, fixed_abs, tag = 'smem constant byte address 0x4 - core index']
  #allocation1 [shape = 'u32[144,128]{1,0:T(1,128)}', space=vmem, size = 0x12000, scoped, tag = 'internal scratch']
  #allocation2 [shape = 'f32[1,1]{1,0:T(1,128)S(1)}', space=vmem, size = 0x200, scoped, tag = 'scoped memory for forward.1']
  %s0 = inlined_call_operand.vmem [shape: f32[8,2], index: 0, kind: input, shape index: {}]
  %s1 = inlined_call_operand.vmem [shape: f32[2,32], index: 1, kind: input, shape index: {}]
  %s2 = inlined_call_operand.vmem [shape: f32[1,32], index: 2, kind: input, shape index: {}]
  %s3 = inlined_call_operand.vmem [shape: f32[32,32], index: 3, kind: input, shape index: {}]
  %s4 = inlined_call_operand.vmem [shape: f32[1,32], index: 4, kind: input, shape index: {}]
  %s5 = inlined_call_operand.vmem [shape: f32[32,1], index: 5, kind: input, shape index: {}]
  %s6 = inlined_call_operand.<no memory space> [shape: f32[1,1], index: 6, kind: input, shape index: {}]
  %s7 = inlined_call_operand.vmem [shape: f32[8,1], index: 7, kind: output, shape index: {}]
  %s8 = sld [smem:[#allocation0]]
  $region38: #{forward.1} parent=0
    _
  %s10 = ssub.s32 1, %s8
  %s11 = scalar_select 0, %s10, %s8
  %v12 = vstv %s6
  %13 = vst [vmem:[#allocation2] sm:$0x1] %v12
  // Predicated region
  $region2: #{forward.1} parent=0 // pred_check
    _
  $region3: #{forward.1} parent=0 // pred_check_branch
    %15 = sbr.rel (0) target = $region5
  $region4: #{forward.1} parent=0 // pred_region
    _
  $region5: #{forward.1} parent=0 // pred_fallthru
    _
  // Predicated region
  $region6: #{forward.1} parent=0 // pred_check
    _
  $region7: #{forward.1} parent=0 // pred_check_branch
    %17 = sbr.rel (0) target = $region9
  $region8: #{forward.1} parent=0 // pred_region
    _
  $region9: #{forward.1} parent=0 // pred_fallthru
    _
  // Predicated region
  $region10: #{forward.1} parent=0 // pred_check
    _
  $region11: #{forward.1} parent=0 // pred_check_branch
    %19 = sbr.rel (0) target = $region13
  $region12: #{forward.1} parent=0 // pred_region
    _
  $region13: #{forward.1} parent=0 // pred_fallthru
    _
  // Predicated region
  $region14: #{forward.1} parent=0 // pred_check
    _
  $region15: #{forward.1} parent=0 // pred_check_branch
    %21 = sbr.rel (0) target = $region17
  $region16: #{forward.1} parent=0 // pred_region
    _
  $region17: #{forward.1} parent=0 // pred_fallthru
    _
  // Predicated region
  $region18: #{forward.1} parent=0 // pred_check
    _
  $region19: #{forward.1} parent=0 // pred_check_branch
    %23 = sbr.rel (0) target = $region21
  $region20: #{forward.1} parent=0 // pred_region
    _
  $region21: #{forward.1} parent=0 // pred_fallthru
    _
  // Predicated region
  $region22: #{forward.1} parent=0 // pred_check
    _
  $region23: #{forward.1} parent=0 // pred_check_branch
    %25 = sbr.rel (0) target = $region25
  $region24: #{forward.1} parent=0 // pred_region
    _
  $region25: #{forward.1} parent=0 // pred_fallthru
    _
  // Predicated region
  $region26: #{forward.1} parent=0 // pred_check
    _
  $region27: #{forward.1} parent=0 // pred_check_branch
    %27 = sbr.rel (0) target = $region29
  $region28: #{forward.1} parent=0 // pred_region
    _
  $region29: #{forward.1} parent=0 // pred_fallthru
    _
  %v28 = vld [vmem:[%s0] sm:$0xff]
  %v29 = vld [vmem:[%s1] sm:$0x3]
  %v30 = vld [vmem:[%s2] sm:$0x1]
  %v32 = vlaneseq
  %v33 = vshrl.u32 %v32, 7
  %v34 = vsub.s32 0, %v33
  %v35 = vrot.slane %v30, %v34
  %vm37 = vcmask 15360
  %v39 = vsel %vm37, %v28, 0
  %vm41 = vcmask 1041408
  %v43 = vsel %vm41, %v29, 0
  %45 = vmatprep.subr.mxu0 0.0
  %46 = vmatpush1.msra.mxu0 %v43
  %47 = vmatprep.subr.mxu0 0.0
  %48 = vmatpush1.msra.mxu0 0.0
  %49 = vmatprep.subr.mxu0 0.0
  %50 = vmatpush1.msra.mxu0 0.0
  %51 = vmatprep.subr.mxu0 0.0
  %52 = vmatpush1.msra.mxu0 0.0
  %53 = vmatprep.subr.mxu0 0.0
  %54 = vmatpush1.msra.mxu0 0.0
  %55 = vmatprep.subr.mxu0 0.0
  %56 = vmatpush1.msra.mxu0 0.0
  %57 = vmatprep.subr.mxu0 0.0
  %58 = vmatpush1.msra.mxu0 0.0
  %59 = vmatprep.subr.mxu0 0.0
  %60 = vmatpush1.msra.mxu0 0.0
  %61 = vmatprep.subr.mxu0 0.0
  %62 = vmatpush1.msra.mxu0 0.0
  %63 = vmatprep.subr.mxu0 0.0
  %64 = vmatpush1.msra.mxu0 0.0
  %65 = vmatprep.subr.mxu0 0.0
  %66 = vmatpush1.msra.mxu0 0.0
  %67 = vmatprep.subr.mxu0 0.0
  %68 = vmatpush1.msra.mxu0 0.0
  %69 = vmatprep.subr.mxu0 0.0
  %70 = vmatpush1.msra.mxu0 0.0
  %71 = vmatprep.subr.mxu0 0.0
  %72 = vmatpush1.msra.mxu0 0.0
  %73 = vmatprep.subr.mxu0 0.0
  %74 = vmatpush1.msra.mxu0 0.0
  %75 = vmatprep.subr.mxu0 0.0
  %76 = vmatpush1.msra.mxu0 0.0
  %77 = vmatprep.subr.mxu0 0.0
  %78 = vmatpush1.msra.mxu0 0.0
  %79 = vmatprep.subr.mxu0 0.0
  %80 = vmatpush1.msra.mxu0 0.0
  %81 = vmatprep.subr.mxu0 0.0
  %82 = vmatpush1.msra.mxu0 0.0
  %83 = vmatprep.subr.mxu0 0.0
  %84 = vmatpush1.msra.mxu0 0.0
  %85 = vmatprep.subr.mxu0 0.0
  %86 = vmatpush1.msra.mxu0 0.0
  %87 = vmatprep.subr.mxu0 0.0
  %88 = vmatpush1.msra.mxu0 0.0
  %89 = vmatprep.subr.mxu0 0.0
  %90 = vmatpush1.msra.mxu0 0.0
  %91 = vmatprep.subr.mxu0 0.0
  %92 = vmatpush1.msra.mxu0 0.0
  %93 = vmatprep.subr.mxu0 0.0
  %94 = vmatpush1.msra.mxu0 0.0
  %95 = vmatprep.subr.mxu0 0.0
  %96 = vmatpush1.msra.mxu0 0.0
  %97 = vmatprep.subr.mxu0 0.0
  %98 = vmatpush1.msra.mxu0 0.0
  %99 = vmatprep.subr.mxu0 0.0
  %100 = vmatpush1.msra.mxu0 0.0
  %101 = vmatprep.subr.mxu0 0.0
  %102 = vmatpush1.msra.mxu0 0.0
  %103 = vmatprep.subr.mxu0 0.0
  %104 = vmatpush1.msra.mxu0 0.0
  %105 = vmatprep.subr.mxu0 0.0
  %106 = vmatpush1.msra.mxu0 0.0
  %107 = vmatprep.subr.mxu0 0.0
  %108 = vmatpush1.msra.mxu0 0.0
  %109 = vmatprep.mubr.f32.mxu0 0.0
  %110 = vmatmul.mubr.f32.gmra.mrb[0].mxu0 %v39
  %v111 = vpop.f32.mrb[0].mxu0
  %v112 = vadd.f32 %v35, %v111
  %v113 = vpop.f32.mrb[0].mxu0
  %114 = vdwg.mxu0
  %v115 = vmax.f32 %v112, 0.0
  %v116 = vld [vmem:[%s3] sm:$0xff]
  %v117 = vld [vmem:[%s3 + $0x8] sm:$0xff]
  %v118 = vld [vmem:[%s3 + $0x10] sm:$0xff]
  %v119 = vld [vmem:[%s3 + $0x18] sm:$0xff]
  %v120 = vld [vmem:[%s4] sm:$0x1]
  %v122 = vlaneseq
  %v123 = vshrl.u32 %v122, 7
  %v124 = vsub.s32 0, %v123
  %v125 = vrot.slane %v120, %v124
  %vm127 = vcmask 261120
  %v129 = vsel %vm127, %v115, 0
  %131 = vmatprep.subr.mxu0 0.0
  %132 = vmatpush1.msra.mxu0 %v116
  %133 = vmatprep.subr.mxu0 0.0
  %134 = vmatpush1.msra.mxu0 %v117
  %135 = vmatprep.subr.mxu0 0.0
  %136 = vmatpush1.msra.mxu0 %v118
  %137 = vmatprep.subr.mxu0 0.0
  %138 = vmatpush1.msra.mxu0 %v119
  %139 = vmatprep.subr.mxu0 0.0
  %140 = vmatpush1.msra.mxu0 0.0
  %141 = vmatprep.subr.mxu0 0.0
  %142 = vmatpush1.msra.mxu0 0.0
  %143 = vmatprep.subr.mxu0 0.0
  %144 = vmatpush1.msra.mxu0 0.0
  %145 = vmatprep.subr.mxu0 0.0
  %146 = vmatpush1.msra.mxu0 0.0
  %147 = vmatprep.subr.mxu0 0.0
  %148 = vmatpush1.msra.mxu0 0.0
  %149 = vmatprep.subr.mxu0 0.0
  %150 = vmatpush1.msra.mxu0 0.0
  %151 = vmatprep.subr.mxu0 0.0
  %152 = vmatpush1.msra.mxu0 0.0
  %153 = vmatprep.subr.mxu0 0.0
  %154 = vmatpush1.msra.mxu0 0.0
  %155 = vmatprep.subr.mxu0 0.0
  %156 = vmatpush1.msra.mxu0 0.0
  %157 = vmatprep.subr.mxu0 0.0
  %158 = vmatpush1.msra.mxu0 0.0
  %159 = vmatprep.subr.mxu0 0.0
  %160 = vmatpush1.msra.mxu0 0.0
  %161 = vmatprep.subr.mxu0 0.0
  %162 = vmatpush1.msra.mxu0 0.0
  %163 = vmatprep.subr.mxu0 0.0
  %164 = vmatpush1.msra.mxu0 0.0
  %165 = vmatprep.subr.mxu0 0.0
  %166 = vmatpush1.msra.mxu0 0.0
  %167 = vmatprep.subr.mxu0 0.0
  %168 = vmatpush1.msra.mxu0 0.0
  %169 = vmatprep.subr.mxu0 0.0
  %170 = vmatpush1.msra.mxu0 0.0
  %171 = vmatprep.subr.mxu0 0.0
  %172 = vmatpush1.msra.mxu0 0.0
  %173 = vmatprep.subr.mxu0 0.0
  %174 = vmatpush1.msra.mxu0 0.0
  %175 = vmatprep.subr.mxu0 0.0
  %176 = vmatpush1.msra.mxu0 0.0
  %177 = vmatprep.subr.mxu0 0.0
  %178 = vmatpush1.msra.mxu0 0.0
  %179 = vmatprep.subr.mxu0 0.0
  %180 = vmatpush1.msra.mxu0 0.0
  %181 = vmatprep.subr.mxu0 0.0
  %182 = vmatpush1.msra.mxu0 0.0
  %183 = vmatprep.subr.mxu0 0.0
  %184 = vmatpush1.msra.mxu0 0.0
  %185 = vmatprep.subr.mxu0 0.0
  %186 = vmatpush1.msra.mxu0 0.0
  %187 = vmatprep.subr.mxu0 0.0
  %188 = vmatpush1.msra.mxu0 0.0
  %189 = vmatprep.subr.mxu0 0.0
  %190 = vmatpush1.msra.mxu0 0.0
  %191 = vmatprep.subr.mxu0 0.0
  %192 = vmatpush1.msra.mxu0 0.0
  %193 = vmatprep.subr.mxu0 0.0
  %194 = vmatpush1.msra.mxu0 0.0
  %195 = vmatprep.mubr.f32.mxu0 0.0
  %196 = vmatmul.mubr.f32.gmra.mrb[0].mxu0 %v129
  %v197 = vpop.f32.mrb[0].mxu0
  %v198 = vadd.f32 %v125, %v197
  %v199 = vpop.f32.mrb[0].mxu0
  %200 = vdwg.mxu0
  %v201 = vmax.f32 %v198, 0.0
  %v202 = vld [vmem:[%s5] sm:$0xff]
  %v203 = vld [vmem:[%s5 + $0x8] sm:$0xff]
  %v204 = vld [vmem:[%s5 + $0x10] sm:$0xff]
  %v205 = vld [vmem:[%s5 + $0x18] sm:$0xff]
  %v206 = vld [vmem:[#allocation2] sm:$0x1]
  %v208 = vlaneseq
  %v209 = vshrl.u32 %v208, 7
  %v210 = vsub.s32 0, %v209
  %v211 = vrot.slane %v206, %v210
  %v214 = vsel %vm127, %v201, 0
  %216 = vmatprep.subr.mxu0 0.0
  %217 = vmatpush1.msra.mxu0 %v202
  %218 = vmatprep.subr.mxu0 0.0
  %219 = vmatpush1.msra.mxu0 %v203
  %220 = vmatprep.subr.mxu0 0.0
  %221 = vmatpush1.msra.mxu0 %v204
  %222 = vmatprep.subr.mxu0 0.0
  %223 = vmatpush1.msra.mxu0 %v205
  %224 = vmatprep.subr.mxu0 0.0
  %225 = vmatpush1.msra.mxu0 0.0
  %226 = vmatprep.subr.mxu0 0.0
  %227 = vmatpush1.msra.mxu0 0.0
  %228 = vmatprep.subr.mxu0 0.0
  %229 = vmatpush1.msra.mxu0 0.0
  %230 = vmatprep.subr.mxu0 0.0
  %231 = vmatpush1.msra.mxu0 0.0
  %232 = vmatprep.subr.mxu0 0.0
  %233 = vmatpush1.msra.mxu0 0.0
  %234 = vmatprep.subr.mxu0 0.0
  %235 = vmatpush1.msra.mxu0 0.0
  %236 = vmatprep.subr.mxu0 0.0
  %237 = vmatpush1.msra.mxu0 0.0
  %238 = vmatprep.subr.mxu0 0.0
  %239 = vmatpush1.msra.mxu0 0.0
  %240 = vmatprep.subr.mxu0 0.0
  %241 = vmatpush1.msra.mxu0 0.0
  %242 = vmatprep.subr.mxu0 0.0
  %243 = vmatpush1.msra.mxu0 0.0
  %244 = vmatprep.subr.mxu0 0.0
  %245 = vmatpush1.msra.mxu0 0.0
  %246 = vmatprep.subr.mxu0 0.0
  %247 = vmatpush1.msra.mxu0 0.0
  %248 = vmatprep.subr.mxu0 0.0
  %249 = vmatpush1.msra.mxu0 0.0
  %250 = vmatprep.subr.mxu0 0.0
  %251 = vmatpush1.msra.mxu0 0.0
  %252 = vmatprep.subr.mxu0 0.0
  %253 = vmatpush1.msra.mxu0 0.0
  %254 = vmatprep.subr.mxu0 0.0
  %255 = vmatpush1.msra.mxu0 0.0
  %256 = vmatprep.subr.mxu0 0.0
  %257 = vmatpush1.msra.mxu0 0.0
  %258 = vmatprep.subr.mxu0 0.0
  %259 = vmatpush1.msra.mxu0 0.0
  %260 = vmatprep.subr.mxu0 0.0
  %261 = vmatpush1.msra.mxu0 0.0
  %262 = vmatprep.subr.mxu0 0.0
  %263 = vmatpush1.msra.mxu0 0.0
  %264 = vmatprep.subr.mxu0 0.0
  %265 = vmatpush1.msra.mxu0 0.0
  %266 = vmatprep.subr.mxu0 0.0
  %267 = vmatpush1.msra.mxu0 0.0
  %268 = vmatprep.subr.mxu0 0.0
  %269 = vmatpush1.msra.mxu0 0.0
  %270 = vmatprep.subr.mxu0 0.0
  %271 = vmatpush1.msra.mxu0 0.0
  %272 = vmatprep.subr.mxu0 0.0
  %273 = vmatpush1.msra.mxu0 0.0
  %274 = vmatprep.subr.mxu0 0.0
  %275 = vmatpush1.msra.mxu0 0.0
  %276 = vmatprep.subr.mxu0 0.0
  %277 = vmatpush1.msra.mxu0 0.0
  %278 = vmatprep.subr.mxu0 0.0
  %279 = vmatpush1.msra.mxu0 0.0
  %280 = vmatprep.mubr.f32.mxu0 0.0
  %281 = vmatmul.mubr.f32.gmra.mrb[0].mxu0 %v214
  %v282 = vpop.f32.mrb[0].mxu0
  %v283 = vadd.f32 %v211, %v282
  %v284 = vpop.f32.mrb[0].mxu0
  %285 = vdwg.mxu0
  %vm286 = vcmask 7168
  %287 = vst.msk [vmem:[%s7] sm:$0xff] %vm286, %v283
  // Predicated region
  $region30: #{forward.1} parent=0 // pred_check
    _
  $region31: #{forward.1} parent=0 // pred_check_branch
    %289 = sbr.rel (0) target = $region33
  $region32: #{forward.1} parent=0 // pred_region
    _
  $region33: #{forward.1} parent=0 // pred_fallthru
    _
  // Predicated region
  $region34: #{forward.1} parent=0 // pred_check
    _
  $region35: #{forward.1} parent=0 // pred_check_branch
    %291 = sbr.rel (0) target = $region37
  $region36: #{forward.1} parent=0 // pred_region
    _
  $region37: #{forward.1} parent=0 // pred_fallthru
    _

</llo_original>
